<compile_context>
chip_gen: v7x
topology: tpu7x:2x2x1
jax: 0.10.0
libtpu: 0.0.40
codegen_flags: <defaults>
</compile_context>

<pallas_src>
import functools

import jax
import jax.numpy as jnp
from jax.experimental import pallas as pl
from jax.experimental.pallas import tpu as pltpu

NUM_IN = 3          # config.num_in_channels
NF = 64             # config.num_filters
H1 = NF * 8         # 512
H2 = NF * 4         # 256
OUT = 1
K_PAD = 16          # layer-1 contraction dim zero-padded 3 -> 16 for the MXU
                    # path (16 = bf16 sublane packing, so w1 is one clean tile)


def _round_up(n, m):
    return ((n + m - 1) // m) * m


def _leaky_relu(x, slope=0.2):
    # mul + max (2 VALU ops) instead of cmp + mul + select (3 ops).
    return jnp.maximum(x, slope * x)


def _make_kernel(use_mxu_l1: bool):
    """Whole MLP forward for one batch tile, fully in VMEM."""

    def kernel(x_ref, w1_ref, b1_ref, w2_ref, b2_ref, w3_ref, b3_ref, o_ref):
        if use_mxu_l1:
            # ---- Linear(3 -> 512) on the MXU (v6e/v7x): bf16 in, f32 acc. ---
            h = jnp.dot(x_ref[...], w1_ref[...],
                        preferred_element_type=jnp.float32)   # (TB, 512) f32
            # Bias + LeakyReLU in bf16 (bf16 VALU on v6e/v7x): half the vregs,
            # and the result feeds the bf16 layer-2 matmul with no extra cast.
            h = h.astype(jnp.bfloat16) + b1_ref[...]          # (TB, 512) bf16
            h = _leaky_relu(h)
        else:
            # ---- v5e path: K=3 on the VPU; all elementwise math in f32. -----
            x = x_ref[...]                                    # (TB, 3) f32
            w1 = w1_ref[...]                                  # (3, 512) f32
            h = (x[:, 0:1] * w1[0:1, :]
                 + x[:, 1:2] * w1[1:2, :]
                 + x[:, 2:3] * w1[2:3, :]) + b1_ref[...]      # (TB, 512) f32
            h = _leaky_relu(h)
            h = h.astype(jnp.bfloat16)                        # MXU wants bf16

        # ---- Linear(512 -> 256) on the MXU: bf16 inputs, f32 accumulation. --
        h2 = jnp.dot(h, w2_ref[...],
                     preferred_element_type=jnp.float32)      # (TB, 256) f32
        h2 = _leaky_relu(h2 + b2_ref[...])

        # ---- Linear(256 -> 1): VPU multiply + XLU lane-reduce (free slot). --
        logit = jnp.sum(h2 * w3_ref[...], axis=-1, keepdims=True) + b3_ref[...]

        # ---- Exact sigmoid: exp on the EUP, one tiny (TB,1) divide. ---------
        o_ref[...] = (1.0 / (1.0 + jnp.exp(-logit))).astype(o_ref.dtype)

    return kernel


def _pick_tile(B, is_v5e, is_v7):
    cap = 1024 if is_v5e else 2048          # v5e: tighter scoped VMEM, f32 temps
    tb = max(16, min(cap, _round_up(B, 16)))  # multiple of 16 (bf16 packing)
    # v7x: keep >= 2 parallel grid steps when the batch allows, so the
    # "parallel" batch axis can shard across both TensorCores.
    if is_v7 and B >= 32 and _round_up(B, tb) // tb < 2:
        tb = _round_up(-(-B // 2), 16)
    return tb


def _vmem_limit_bytes(tb, is_v7, bf16_act):
    """Scoped-VMEM request sized from the kernel's actual per-tile temporaries."""
    act = 2 if bf16_act else 4
    big = tb * H1 * act + tb * H2 * 4            # one copy each of h1, h2
    # ~4 concurrently-live copies of the big activations (compiler temps),
    # double-buffered lane-padded x/out tiles, weights + slack.
    est = 4 * big + 2 * tb * 128 * (4 + act) + (4 << 20)
    cap = (48 << 20) if is_v7 else (100 << 20)   # v7x has 64 MiB physical VMEM
    return int(min(max(est, 32 << 20), cap))


@functools.partial(jax.jit, static_argnames=("tb", "use_mxu_l1", "vmem_limit"))
def _forward_impl(x, w1, b1, w2, b2, w3, b3, *, tb, use_mxu_l1, vmem_limit):
    B = x.shape[0]
    B_pad = _round_up(B, tb)

    if use_mxu_l1:
        # Zero-pad K 3 -> K_PAD and cast LHS / RHS / bias to bf16 wrapper-side.
        x_in = jnp.zeros((B_pad, K_PAD), jnp.bfloat16)
        x_in = x_in.at[:B, :NUM_IN].set(x.astype(jnp.bfloat16))
        w1_in = jnp.zeros((K_PAD, H1), jnp.bfloat16)
        w1_in = w1_in.at[:NUM_IN, :].set(w1.astype(jnp.bfloat16))
        b1_in = b1.astype(jnp.bfloat16)
        xk = K_PAD
    else:
        x_in = jnp.pad(x, ((0, B_pad - B), (0, 0)))           # (B_pad, 3) f32
        w1_in = w1
        b1_in = b1
        xk = NUM_IN

    # MXU is bf16-native on all target chips; cast the big weight once.
    w2_bf16 = w2.astype(jnp.bfloat16)
    # Present w3 as a (1, 256) row so the kernel can broadcast it on the VPU.
    w3_row = jnp.reshape(w3, (1, H2))

    grid = (B_pad // tb,)
    full = lambda i: (0, 0)   # weights/biases: constant block, VMEM-resident

    flops = 2 * B_pad * (NUM_IN * H1 + H1 * H2 + H2)
    bytes_accessed = (x_in.size * x_in.dtype.itemsize
                      + w1_in.size * w1_in.dtype.itemsize
                      + b1_in.size * b1_in.dtype.itemsize
                      + w2_bf16.size * 2 + b2.size * 4
                      + w3.size * 4 + b3.size * 4 + B_pad * OUT * 4)
    cost = pl.CostEstimate(flops=flops, transcendentals=B_pad,
                           bytes_accessed=bytes_accessed)

    out = pl.pallas_call(
        _make_kernel(use_mxu_l1),
        out_shape=jax.ShapeDtypeStruct((B_pad, OUT), jnp.float32),
        grid_spec=pltpu.PrefetchScalarGridSpec(
            num_scalar_prefetch=0,
            grid=grid,
            in_specs=[
                pl.BlockSpec((tb, xk), lambda i: (i, 0)),     # x tile
                pl.BlockSpec((xk, H1), full),                 # w1
                pl.BlockSpec((1, H1), full),                  # b1
                pl.BlockSpec((H1, H2), full),                 # w2 (bf16)
                pl.BlockSpec((1, H2), full),                  # b2
                pl.BlockSpec((1, H2), full),                  # w3 row
                pl.BlockSpec((1, OUT), full),                 # b3
            ],
            out_specs=pl.BlockSpec((tb, OUT), lambda i: (i, 0)),
        ),
        compiler_params=pltpu.CompilerParams(
            dimension_semantics=("parallel",),
            vmem_limit_bytes=vmem_limit),
        cost_estimate=cost,
    )(x_in, w1_in, b1_in, w2_bf16, b2, w3_row, b3)

    return out[:B]


def discriminator_forward(x, params, *, tile_b=None):
    """x: (B, 3) float32.  Returns (B, 1) float32 in [0, 1]."""
    w1, b1, w2, b2, w3, b3 = params
    B, F = x.shape
    assert F == NUM_IN

    kind = jax.devices()[0].device_kind.lower()
    is_v5e = ("v5 lite" in kind) or ("v5e" in kind) or ("v5litepod" in kind)
    is_v7 = "v7" in kind
    # v5e's 197 TF/s MXU would become the bottleneck for layer 1; keep it on
    # the VPU there.  Everything else gets the MXU offload.
    use_mxu_l1 = not is_v5e

    if tile_b is None:
        tb = _pick_tile(B, is_v5e, is_v7)
    else:
        tb = max(16, _round_up(min(tile_b, B), 16))
    vmem_limit = _vmem_limit_bytes(tb, is_v7, bf16_act=use_mxu_l1)

    return _forward_impl(x, w1, b1, w2, b2, w3, b3,
                         tb=tb, use_mxu_l1=use_mxu_l1, vmem_limit=vmem_limit)


def init_params(key):
    """Deterministic synthetic parameters (same shapes as the torch module)."""
    ks = jax.random.split(key, 6)

    def linear(kw, kb, fan_in, fan_out):
        # torch nn.Linear default: U(-1/sqrt(fan_in), 1/sqrt(fan_in))
        bound = 1.0 / (fan_in ** 0.5)
        w = jax.random.uniform(kw, (fan_in, fan_out), jnp.float32, -bound, bound)
        b = jax.random.uniform(kb, (1, fan_out), jnp.float32, -bound, bound)
        return w, b

    w1, b1 = linear(ks[0], ks[1], NUM_IN, H1)
    w2, b2 = linear(ks[2], ks[3], H1, H2)
    w3, b3 = linear(ks[4], ks[5], H2, OUT)
    return (w1, b1, w2, b2, w3, b3)


def reference_forward(x, params):
    """Pure-JAX f32 reference for correctness check."""
    w1, b1, w2, b2, w3, b3 = params
    h = x @ w1 + b1
    h = jnp.where(h >= 0, h, 0.2 * h)
    h = h @ w2 + b2
    h = jnp.where(h >= 0, h, 0.2 * h)
    return jax.nn.sigmoid(h @ w3 + b3)


if __name__ == "__main__":
    key = jax.random.PRNGKey(0)
    kx, kp = jax.random.split(key)

    B = 16
    x = jax.random.normal(kx, (B, NUM_IN), dtype=jnp.float32)
    params = init_params(kp)

    out = discriminator_forward(x, params)
    out = jax.block_until_ready(out)

    ref = reference_forward(x, params)
    assert out.shape == (B, 1)
    err = float(jnp.max(jnp.abs(out - ref)))
    # bf16 layer-1/layer-2 matmuls (f32 accumulation) bound the error well
    # below this on a sigmoid output.
    assert err < 2e-2, f"mismatch: max abs err {err}"

    print("KERNEL_OK")
</pallas_src>

<mosaic_0001>
module attributes {stable_mosaic.version = 11 : i64} {
  func.func @kernel(%arg0: i32, %arg1: memref<16x16xbf16, #tpu.memory_space<vmem>>, %arg2: memref<16x512xbf16, #tpu.memory_space<vmem>>, %arg3: memref<1x512xbf16, #tpu.memory_space<vmem>>, %arg4: memref<512x256xbf16, #tpu.memory_space<vmem>>, %arg5: memref<1x256xf32, #tpu.memory_space<vmem>>, %arg6: memref<1x256xf32, #tpu.memory_space<vmem>>, %arg7: memref<1x1xf32, #tpu.memory_space<vmem>>, %arg8: memref<16x1xf32, #tpu.memory_space<vmem>>) attributes {dimension_semantics = [#tpu.dimension_semantics<parallel>], iteration_bounds = array<i64: 1>, scalar_prefetch = 0 : i64, scratch_operands = 0 : i64, tpu.core_type = #tpu.core_type<tc>, window_params = [{transform_indices = @transform_0, window_bounds = array<i64: 16, 16>}, {pipeline_mode = #tpu.pipeline_mode<synchronous>, transform_indices = @transform_1, window_bounds = array<i64: 16, 512>}, {pipeline_mode = #tpu.pipeline_mode<synchronous>, transform_indices = @transform_2, window_bounds = array<i64: 1, 512>}, {pipeline_mode = #tpu.pipeline_mode<synchronous>, transform_indices = @transform_3, window_bounds = array<i64: 512, 256>}, {pipeline_mode = #tpu.pipeline_mode<synchronous>, transform_indices = @transform_4, window_bounds = array<i64: 1, 256>}, {pipeline_mode = #tpu.pipeline_mode<synchronous>, transform_indices = @transform_5, window_bounds = array<i64: 1, 256>}, {pipeline_mode = #tpu.pipeline_mode<synchronous>, transform_indices = @transform_6, window_bounds = array<i64: 1, 1>}, {transform_indices = @transform_7, window_bounds = array<i64: 16, 1>}]} {
    %c0 = arith.constant 0 : index
    %c0_0 = arith.constant 0 : index
    %0 = vector.load %arg1[%c0, %c0_0] : memref<16x16xbf16, #tpu.memory_space<vmem>>, vector<16x16xbf16>
    %c0_1 = arith.constant 0 : index
    %c0_2 = arith.constant 0 : index
    %1 = vector.load %arg2[%c0_1, %c0_2] : memref<16x512xbf16, #tpu.memory_space<vmem>>, vector<16x512xbf16>
    %cst = arith.constant dense<0.000000e+00> : vector<16x512xf32>
    %2 = tpu.matmul %0, %1, %cst {dimension_numbers = #tpu.dot_dimension_numbers<[1], [0], [0], [1], [0, 0, 1, 1], [], []>} : vector<16x16xbf16>, vector<16x512xbf16>, vector<16x512xf32> -> vector<16x512xf32>
    %3 = arith.truncf %2 : vector<16x512xf32> to vector<16x512xbf16>
    %c0_3 = arith.constant 0 : index
    %c0_4 = arith.constant 0 : index
    %4 = vector.load %arg3[%c0_3, %c0_4] : memref<1x512xbf16, #tpu.memory_space<vmem>>, vector<1x512xbf16>
    %5 = vector.broadcast %4 : vector<1x512xbf16> to vector<16x512xbf16>
    %6 = arith.addf %3, %5 : vector<16x512xbf16>
    %cst_5 = arith.constant 2.001950e-01 : bf16
    %7 = vector.broadcast %cst_5 : bf16 to vector<16x512xbf16>
    %8 = arith.mulf %7, %6 : vector<16x512xbf16>
    %9 = arith.maximumf %6, %8 : vector<16x512xbf16>
    %c0_6 = arith.constant 0 : index
    %c0_7 = arith.constant 0 : index
    %10 = vector.load %arg4[%c0_6, %c0_7] : memref<512x256xbf16, #tpu.memory_space<vmem>>, vector<512x256xbf16>
    %cst_8 = arith.constant dense<0.000000e+00> : vector<16x256xf32>
    %11 = tpu.matmul %9, %10, %cst_8 {dimension_numbers = #tpu.dot_dimension_numbers<[1], [0], [0], [1], [0, 0, 1, 1], [], []>} : vector<16x512xbf16>, vector<512x256xbf16>, vector<16x256xf32> -> vector<16x256xf32>
    %c0_9 = arith.constant 0 : index
    %c0_10 = arith.constant 0 : index
    %12 = vector.load %arg5[%c0_9, %c0_10] : memref<1x256xf32, #tpu.memory_space<vmem>>, vector<1x256xf32>
    %13 = vector.broadcast %12 : vector<1x256xf32> to vector<16x256xf32>
    %14 = arith.addf %11, %13 : vector<16x256xf32>
    %cst_11 = arith.constant 2.000000e-01 : f32
    %15 = vector.broadcast %cst_11 : f32 to vector<16x256xf32>
    %16 = arith.mulf %15, %14 : vector<16x256xf32>
    %17 = arith.maximumf %14, %16 : vector<16x256xf32>
    %c0_12 = arith.constant 0 : index
    %c0_13 = arith.constant 0 : index
    %18 = vector.load %arg6[%c0_12, %c0_13] : memref<1x256xf32, #tpu.memory_space<vmem>>, vector<1x256xf32>
    %19 = vector.broadcast %18 : vector<1x256xf32> to vector<16x256xf32>
    %20 = arith.mulf %17, %19 : vector<16x256xf32>
    %cst_14 = arith.constant dense<0.000000e+00> : vector<16xf32>
    %21 = vector.multi_reduction <add>, %20, %cst_14 [1] : vector<16x256xf32> to vector<16xf32>
    %22 = vector.shape_cast %21 : vector<16xf32> to vector<16x1xf32>
    %c0_15 = arith.constant 0 : index
    %c0_16 = arith.constant 0 : index
    %23 = vector.load %arg7[%c0_15, %c0_16] : memref<1x1xf32, #tpu.memory_space<vmem>>, vector<1x1xf32>
    %24 = vector.broadcast %23 : vector<1x1xf32> to vector<16x1xf32>
    %25 = arith.addf %22, %24 : vector<16x1xf32>
    %cst_17 = arith.constant 0.000000e+00 : f32
    %26 = vector.broadcast %cst_17 : f32 to vector<16x1xf32>
    %27 = arith.subf %26, %25 : vector<16x1xf32>
    %28 = math.exp %27 : vector<16x1xf32>
    %cst_18 = arith.constant 1.000000e+00 : f32
    %29 = vector.broadcast %cst_18 : f32 to vector<16x1xf32>
    %30 = arith.addf %29, %28 : vector<16x1xf32>
    %cst_19 = arith.constant 1.000000e+00 : f32
    %31 = vector.broadcast %cst_19 : f32 to vector<16x1xf32>
    %32 = arith.divf %31, %30 : vector<16x1xf32>
    %c0_20 = arith.constant 0 : index
    %c0_21 = arith.constant 0 : index
    %33 = vector.load %arg8[%c0_20, %c0_21] : memref<16x1xf32, #tpu.memory_space<vmem>>, vector<16x1xf32>
    tpu.vector_store %arg8[%c0_20, %c0_21], %32 {strides = array<i32>} : memref<16x1xf32, #tpu.memory_space<vmem>>, vector<16x1xf32>,
    return
  }
  func.func @transform_0(%arg0: i32) -> (i32, i32) {
    %c0_i32 = arith.constant 0 : i32
    %c0_i32_0 = arith.constant 0 : i32
    return %arg0, %c0_i32 : i32, i32
  }
  func.func @transform_1(%arg0: i32) -> (i32, i32) {
    %c0_i32 = arith.constant 0 : i32
    %c0_i32_0 = arith.constant 0 : i32
    %c0_i32_1 = arith.constant 0 : i32
    return %c0_i32, %c0_i32_0 : i32, i32
  }
  func.func @transform_2(%arg0: i32) -> (i32, i32) {
    %c0_i32 = arith.constant 0 : i32
    %c0_i32_0 = arith.constant 0 : i32
    %c0_i32_1 = arith.constant 0 : i32
    return %c0_i32, %c0_i32_0 : i32, i32
  }
  func.func @transform_3(%arg0: i32) -> (i32, i32) {
    %c0_i32 = arith.constant 0 : i32
    %c0_i32_0 = arith.constant 0 : i32
    %c0_i32_1 = arith.constant 0 : i32
    return %c0_i32, %c0_i32_0 : i32, i32
  }
  func.func @transform_4(%arg0: i32) -> (i32, i32) {
    %c0_i32 = arith.constant 0 : i32
    %c0_i32_0 = arith.constant 0 : i32
    %c0_i32_1 = arith.constant 0 : i32
    return %c0_i32, %c0_i32_0 : i32, i32
  }
  func.func @transform_5(%arg0: i32) -> (i32, i32) {
    %c0_i32 = arith.constant 0 : i32
    %c0_i32_0 = arith.constant 0 : i32
    %c0_i32_1 = arith.constant 0 : i32
    return %c0_i32, %c0_i32_0 : i32, i32
  }
  func.func @transform_6(%arg0: i32) -> (i32, i32) {
    %c0_i32 = arith.constant 0 : i32
    %c0_i32_0 = arith.constant 0 : i32
    %c0_i32_1 = arith.constant 0 : i32
    return %c0_i32, %c0_i32_0 : i32, i32
  }
  func.func @transform_7(%arg0: i32) -> (i32, i32) {
    %c0_i32 = arith.constant 0 : i32
    %c0_i32_0 = arith.constant 0 : i32
    return %arg0, %c0_i32 : i32, i32
  }
}

</mosaic_0001>

<llo_original>
// kernel: _forward_impl.1
$region0: #{_forward_impl.1}
  #allocation0 [shape = 'u32[]', space=smem, size = 0x4, offset = 0x4, fixed_abs, tag = 'smem constant byte address 0x4 - core index']
  #allocation1 [shape = 'u32[144,128]{1,0:T(1,128)}', space=vmem, size = 0x12000, scoped, tag = 'internal scratch']
  #allocation2 [shape = 'f32[1,1]{1,0:T(1,128)S(1)}', space=vmem, size = 0x200, scoped, tag = 'scoped memory for _forward_impl.1']
  %s0 = inlined_call_operand.vmem [shape: bf16[16,16], index: 0, kind: input, shape index: {}]
  %s1 = inlined_call_operand.vmem [shape: bf16[16,512], index: 1, kind: input, shape index: {}]
  %s2 = inlined_call_operand.vmem [shape: bf16[1,512], index: 2, kind: input, shape index: {}]
  %s3 = inlined_call_operand.vmem [shape: bf16[512,256], index: 3, kind: input, shape index: {}]
  %s4 = inlined_call_operand.vmem [shape: f32[1,256], index: 4, kind: input, shape index: {}]
  %s5 = inlined_call_operand.vmem [shape: f32[1,256], index: 5, kind: input, shape index: {}]
  %s6 = inlined_call_operand.<no memory space> [shape: f32[1,1], index: 6, kind: input, shape index: {}]
  %s7 = inlined_call_operand.vmem [shape: f32[16,1], index: 7, kind: output, shape index: {}]
  %s8 = sld [smem:[#allocation0]]
  $region38: #{_forward_impl.1} parent=0
    _
  %s10 = ssub.s32 1, %s8
  %s11 = scalar_select 0, %s10, %s8
  %v12 = vstv %s6
  %13 = vst [vmem:[#allocation2] sm:$0x1] %v12
  // Predicated region
  $region2: #{_forward_impl.1} parent=0 // pred_check
    _
  $region3: #{_forward_impl.1} parent=0 // pred_check_branch
    %15 = sbr.rel (0) target = $region5
  $region4: #{_forward_impl.1} parent=0 // pred_region
    _
  $region5: #{_forward_impl.1} parent=0 // pred_fallthru
    _
  // Predicated region
  $region6: #{_forward_impl.1} parent=0 // pred_check
    _
  $region7: #{_forward_impl.1} parent=0 // pred_check_branch
    %17 = sbr.rel (0) target = $region9
  $region8: #{_forward_impl.1} parent=0 // pred_region
    _
  $region9: #{_forward_impl.1} parent=0 // pred_fallthru
    _
  // Predicated region
  $region10: #{_forward_impl.1} parent=0 // pred_check
    _
  $region11: #{_forward_impl.1} parent=0 // pred_check_branch
    %19 = sbr.rel (0) target = $region13
  $region12: #{_forward_impl.1} parent=0 // pred_region
    _
  $region13: #{_forward_impl.1} parent=0 // pred_fallthru
    _
  // Predicated region
  $region14: #{_forward_impl.1} parent=0 // pred_check
    _
  $region15: #{_forward_impl.1} parent=0 // pred_check_branch
    %21 = sbr.rel (0) target = $region17
  $region16: #{_forward_impl.1} parent=0 // pred_region
    _
  $region17: #{_forward_impl.1} parent=0 // pred_fallthru
    _
  // Predicated region
  $region18: #{_forward_impl.1} parent=0 // pred_check
    _
  $region19: #{_forward_impl.1} parent=0 // pred_check_branch
    %23 = sbr.rel (0) target = $region21
  $region20: #{_forward_impl.1} parent=0 // pred_region
    _
  $region21: #{_forward_impl.1} parent=0 // pred_fallthru
    _
  // Predicated region
  $region22: #{_forward_impl.1} parent=0 // pred_check
    _
  $region23: #{_forward_impl.1} parent=0 // pred_check_branch
    %25 = sbr.rel (0) target = $region25
  $region24: #{_forward_impl.1} parent=0 // pred_region
    _
  $region25: #{_forward_impl.1} parent=0 // pred_fallthru
    _
  // Predicated region
  $region26: #{_forward_impl.1} parent=0 // pred_check
    _
  $region27: #{_forward_impl.1} parent=0 // pred_check_branch
    %27 = sbr.rel (0) target = $region29
  $region28: #{_forward_impl.1} parent=0 // pred_region
    _
  $region29: #{_forward_impl.1} parent=0 // pred_fallthru
    _
  %v30 = vld [vmem:[%s0] sm:$0xf]
  %v31 = vld [vmem:[%s0 + $0x4] sm:$0xf]
  %v32 = vld [vmem:[%s1] sm:$0xff]
  %v33 = vld [vmem:[%s1 + $0x8] sm:$0xff]
  %v34 = vld [vmem:[%s1 + $0x10] sm:$0xff]
  %v35 = vld [vmem:[%s1 + $0x18] sm:$0xff]
  %v38 = vunpack.c.l.b16 %v30
  %v39 = vunpack.c.l.b16 %v31
  %v40 = vpack.c.b16 %v39, %v38
  %v45 = vunpack.c.l.b16 %v32
  %v46 = vunpack.c.h.b16 %v32
  %v47 = vunpack.c.l.b16 %v33
  %v48 = vunpack.c.h.b16 %v33
  %v49 = vunpack.c.l.b16 %v34
  %v50 = vunpack.c.h.b16 %v34
  %v51 = vunpack.c.l.b16 %v35
  %v52 = vunpack.c.h.b16 %v35
  %v53 = vpack.c.b16 %v49, %v45
  %v54 = vpack.c.b16 %v50, %v46
  %v55 = vpack.c.b16 %v51, %v47
  %v56 = vpack.c.b16 %v52, %v48
  %vm61 = vcmask 130048
  %v63 = vsel %vm61, %v40, 0
  %65 = vmatprep.subr.bf16.mxu0 %v54
  %66 = vmatpush1.bf16.msra.mxu0 %v53
  %67 = vmatprep.subr.bf16.mxu0 0
  %68 = vmatpush1.bf16.msra.mxu0 0
  %69 = vmatprep.subr.bf16.mxu0 0
  %70 = vmatpush1.bf16.msra.mxu0 0
  %71 = vmatprep.subr.bf16.mxu0 0
  %72 = vmatpush1.bf16.msra.mxu0 0
  %73 = vmatprep.subr.bf16.mxu0 0
  %74 = vmatpush1.bf16.msra.mxu0 0
  %75 = vmatprep.subr.bf16.mxu0 0
  %76 = vmatpush1.bf16.msra.mxu0 0
  %77 = vmatprep.subr.bf16.mxu0 0
  %78 = vmatpush1.bf16.msra.mxu0 0
  %79 = vmatprep.subr.bf16.mxu0 0
  %80 = vmatpush1.bf16.msra.mxu0 0
  %81 = vmatprep.subr.bf16.mxu0 0
  %82 = vmatpush1.bf16.msra.mxu0 0
  %83 = vmatprep.subr.bf16.mxu0 0
  %84 = vmatpush1.bf16.msra.mxu0 0
  %85 = vmatprep.subr.bf16.mxu0 0
  %86 = vmatpush1.bf16.msra.mxu0 0
  %87 = vmatprep.subr.bf16.mxu0 0
  %88 = vmatpush1.bf16.msra.mxu0 0
  %89 = vmatprep.subr.bf16.mxu0 0
  %90 = vmatpush1.bf16.msra.mxu0 0
  %91 = vmatprep.subr.bf16.mxu0 0
  %92 = vmatpush1.bf16.msra.mxu0 0
  %93 = vmatprep.subr.bf16.mxu0 0
  %94 = vmatpush1.bf16.msra.mxu0 0
  %95 = vmatprep.subr.bf16.mxu0 0
  %96 = vmatpush1.bf16.msra.mxu0 0
  %97 = vmatprep.mubr.bf16.mxu0 0
  %98 = vmatmul.mubr.bf16.gmra.mrb[0].mxu0 %v63
  %v99 = vpop.f32.mrb[0].mxu0
  %v100 = vadd.f32 0.0, %v99
  %v101 = vpop.f32.mrb[0].mxu0
  %v102 = vadd.f32 0.0, %v101
  %v103 = vpop.f32.mrb[0].mxu0
  %v104 = vadd.f32 0.0, %v103
  %v105 = vpop.f32.mrb[0].mxu0
  %v106 = vadd.f32 0.0, %v105
  %107 = vdwg.mxu0
  %108 = vmatprep.subr.bf16.mxu0 %v56
  %109 = vmatpush1.bf16.msra.mxu0 %v55
  %110 = vmatprep.subr.bf16.mxu0 0
  %111 = vmatpush1.bf16.msra.mxu0 0
  %112 = vmatprep.subr.bf16.mxu0 0
  %113 = vmatpush1.bf16.msra.mxu0 0
  %114 = vmatprep.subr.bf16.mxu0 0
  %115 = vmatpush1.bf16.msra.mxu0 0
  %116 = vmatprep.subr.bf16.mxu0 0
  %117 = vmatpush1.bf16.msra.mxu0 0
  %118 = vmatprep.subr.bf16.mxu0 0
  %119 = vmatpush1.bf16.msra.mxu0 0
  %120 = vmatprep.subr.bf16.mxu0 0
  %121 = vmatpush1.bf16.msra.mxu0 0
  %122 = vmatprep.subr.bf16.mxu0 0
  %123 = vmatpush1.bf16.msra.mxu0 0
  %124 = vmatprep.subr.bf16.mxu0 0
  %125 = vmatpush1.bf16.msra.mxu0 0
  %126 = vmatprep.subr.bf16.mxu0 0
  %127 = vmatpush1.bf16.msra.mxu0 0
  %128 = vmatprep.subr.bf16.mxu0 0
  %129 = vmatpush1.bf16.msra.mxu0 0
  %130 = vmatprep.subr.bf16.mxu0 0
  %131 = vmatpush1.bf16.msra.mxu0 0
  %132 = vmatprep.subr.bf16.mxu0 0
  %133 = vmatpush1.bf16.msra.mxu0 0
  %134 = vmatprep.subr.bf16.mxu0 0
  %135 = vmatpush1.bf16.msra.mxu0 0
  %136 = vmatprep.subr.bf16.mxu0 0
  %137 = vmatpush1.bf16.msra.mxu0 0
  %138 = vmatprep.subr.bf16.mxu0 0
  %139 = vmatpush1.bf16.msra.mxu0 0
  %140 = vmatprep.mubr.bf16.mxu0 0
  %141 = vmatmul.mubr.bf16.gmra.mrb[0].mxu0 %v63
  %v142 = vpop.f32.mrb[0].mxu0
  %v143 = vadd.f32 0.0, %v142
  %v144 = vpop.f32.mrb[0].mxu0
  %v145 = vadd.f32 0.0, %v144
  %v146 = vpop.f32.mrb[0].mxu0
  %v147 = vadd.f32 0.0, %v146
  %v148 = vpop.f32.mrb[0].mxu0
  %v149 = vadd.f32 0.0, %v148
  %150 = vdwg.mxu0
  %v151 = vpack.c.bf16 %v104, %v100
  %v152 = vpack.c.bf16 %v106, %v102
  %v153 = vpack.c.bf16 %v147, %v143
  %v154 = vpack.c.bf16 %v149, %v145
  %v155 = vld [vmem:[%s2] sm:$0xf]
  %v158 = vunpack.c.l.s4 1966171168
  %v159 = vunpack.c.0.s8 %v158
  %v160 = vlaneseq
  %v161 = vshrl.u32 %v160, 7
  %v162 = vsub.s32 %v159, %v161
  %v163 = vrot.slane %v155, %v162
  %v164 = vcombine.high %v163, %v163
  %v166 = vunpack.c.l.s4 1966171168
  %v167 = vunpack.c.0.s8 %v166
  %v168 = vlaneseq
  %v169 = vshrl.u32 %v168, 7
  %v170 = vsub.s32 %v167, %v169
  %v171 = vrot.slane %v163, %v170
  %v173 = vunpack.c.l.s4 1966171168
  %v174 = vunpack.c.0.s8 %v173
  %v175 = vlaneseq
  %v176 = vshrl.u32 %v175, 7
  %v177 = vsub.s32 %v174, %v176
  %v178 = vrot.slane %v164, %v177
  %v179 = vcombine.high %v171, %v171
  %v180 = vcombine.high %v178, %v178
  %v182 = vpack.i.b16 %v171, %v171
  %v184 = vlaneseq
  %v185 = vshrl.u32 %v184, 7
  %v186 = vsub.s32 0, %v185
  %v187 = vrot.slane %v182, %v186
  %v189 = vpack.i.b16 %v178, %v178
  %v191 = vlaneseq
  %v192 = vshrl.u32 %v191, 7
  %v193 = vsub.s32 0, %v192
  %v194 = vrot.slane %v189, %v193
  %v196 = vpack.i.b16 %v179, %v179
  %v198 = vlaneseq
  %v199 = vshrl.u32 %v198, 7
  %v200 = vsub.s32 0, %v199
  %v201 = vrot.slane %v196, %v200
  %v203 = vpack.i.b16 %v180, %v180
  %v205 = vlaneseq
  %v206 = vshrl.u32 %v205, 7
  %v207 = vsub.s32 0, %v206
  %v208 = vrot.slane %v203, %v207
  %v209 = vadd.bf16 %v151, %v187
  %v210 = vadd.bf16 %v152, %v194
  %v211 = vadd.bf16 %v153, %v201
  %v212 = vadd.bf16 %v154, %v208
  %v213 = vmul.bf16 %v209, 1045249613
  %v214 = vmul.bf16 %v210, 1045249613
  %v215 = vmul.bf16 %v211, 1045249613
  %v216 = vmul.bf16 %v212, 1045249613
  %v217 = vmax.bf16 %v209, %v213
  %v218 = vmax.bf16 %v210, %v214
  %v219 = vmax.bf16 %v211, %v215
  %v220 = vmax.bf16 %v212, %v216
  %v221 = vld [vmem:[%s3] sm:$0xff]
  %v222 = vld [vmem:[%s3 + $0x8] sm:$0xff]
  %v223 = vld [vmem:[%s3 + $0x10] sm:$0xff]
  %v224 = vld [vmem:[%s3 + $0x18] sm:$0xff]
  %v225 = vld [vmem:[%s3 + $0x20] sm:$0xff]
  %v226 = vld [vmem:[%s3 + $0x28] sm:$0xff]
  %v227 = vld [vmem:[%s3 + $0x30] sm:$0xff]
  %v228 = vld [vmem:[%s3 + $0x38] sm:$0xff]
  %v229 = vld [vmem:[%s3 + $0x40] sm:$0xff]
  %v230 = vld [vmem:[%s3 + $0x48] sm:$0xff]
  %v231 = vld [vmem:[%s3 + $0x50] sm:$0xff]
  %v232 = vld [vmem:[%s3 + $0x58] sm:$0xff]
  %v233 = vld [vmem:[%s3 + $0x60] sm:$0xff]
  %v234 = vld [vmem:[%s3 + $0x68] sm:$0xff]
  %v235 = vld [vmem:[%s3 + $0x70] sm:$0xff]
  %v236 = vld [vmem:[%s3 + $0x78] sm:$0xff]
  %v237 = vld [vmem:[%s3 + $0x80] sm:$0xff]
  %v238 = vld [vmem:[%s3 + $0x88] sm:$0xff]
  %v239 = vld [vmem:[%s3 + $0x90] sm:$0xff]
  %v240 = vld [vmem:[%s3 + $0x98] sm:$0xff]
  %v241 = vld [vmem:[%s3 + $0xa0] sm:$0xff]
  %v242 = vld [vmem:[%s3 + $0xa8] sm:$0xff]
  %v243 = vld [vmem:[%s3 + $0xb0] sm:$0xff]
  %v244 = vld [vmem:[%s3 + $0xb8] sm:$0xff]
  %v245 = vld [vmem:[%s3 + $0xc0] sm:$0xff]
  %v246 = vld [vmem:[%s3 + $0xc8] sm:$0xff]
  %v247 = vld [vmem:[%s3 + $0xd0] sm:$0xff]
  %v248 = vld [vmem:[%s3 + $0xd8] sm:$0xff]
  %v249 = vld [vmem:[%s3 + $0xe0] sm:$0xff]
  %v250 = vld [vmem:[%s3 + $0xe8] sm:$0xff]
  %v251 = vld [vmem:[%s3 + $0xf0] sm:$0xff]
  %v252 = vld [vmem:[%s3 + $0xf8] sm:$0xff]
  %v253 = vld [vmem:[%s3 + $0x100] sm:$0xff]
  %v254 = vld [vmem:[%s3 + $0x108] sm:$0xff]
  %v255 = vld [vmem:[%s3 + $0x110] sm:$0xff]
  %v256 = vld [vmem:[%s3 + $0x118] sm:$0xff]
  %v257 = vld [vmem:[%s3 + $0x120] sm:$0xff]
  %v258 = vld [vmem:[%s3 + $0x128] sm:$0xff]
  %v259 = vld [vmem:[%s3 + $0x130] sm:$0xff]
  %v260 = vld [vmem:[%s3 + $0x138] sm:$0xff]
  %v261 = vld [vmem:[%s3 + $0x140] sm:$0xff]
  %v262 = vld [vmem:[%s3 + $0x148] sm:$0xff]
  %v263 = vld [vmem:[%s3 + $0x150] sm:$0xff]
  %v264 = vld [vmem:[%s3 + $0x158] sm:$0xff]
  %v265 = vld [vmem:[%s3 + $0x160] sm:$0xff]
  %v266 = vld [vmem:[%s3 + $0x168] sm:$0xff]
  %v267 = vld [vmem:[%s3 + $0x170] sm:$0xff]
  %v268 = vld [vmem:[%s3 + $0x178] sm:$0xff]
  %v269 = vld [vmem:[%s3 + $0x180] sm:$0xff]
  %v270 = vld [vmem:[%s3 + $0x188] sm:$0xff]
  %v271 = vld [vmem:[%s3 + $0x190] sm:$0xff]
  %v272 = vld [vmem:[%s3 + $0x198] sm:$0xff]
  %v273 = vld [vmem:[%s3 + $0x1a0] sm:$0xff]
  %v274 = vld [vmem:[%s3 + $0x1a8] sm:$0xff]
  %v275 = vld [vmem:[%s3 + $0x1b0] sm:$0xff]
  %v276 = vld [vmem:[%s3 + $0x1b8] sm:$0xff]
  %v277 = vld [vmem:[%s3 + $0x1c0] sm:$0xff]
  %v278 = vld [vmem:[%s3 + $0x1c8] sm:$0xff]
  %v279 = vld [vmem:[%s3 + $0x1d0] sm:$0xff]
  %v280 = vld [vmem:[%s3 + $0x1d8] sm:$0xff]
  %v281 = vld [vmem:[%s3 + $0x1e0] sm:$0xff]
  %v282 = vld [vmem:[%s3 + $0x1e8] sm:$0xff]
  %v283 = vld [vmem:[%s3 + $0x1f0] sm:$0xff]
  %v284 = vld [vmem:[%s3 + $0x1f8] sm:$0xff]
  %v285 = vld [vmem:[%s4] sm:$0x3]
  %v287 = vlaneseq
  %v288 = vshrl.u32 %v287, 7
  %v289 = vsub.s32 0, %v288
  %v290 = vrot.slane %v285, %v289
  %v291 = vlaneseq
  %v292 = vshrl.u32 %v291, 7
  %v293 = vsub.s32 1, %v292
  %v294 = vrot.slane %v285, %v293
  %v361 = vunpack.c.l.b16 %v221
  %v362 = vunpack.c.h.b16 %v221
  %v363 = vunpack.c.l.b16 %v222
  %v364 = vunpack.c.h.b16 %v222
  %v365 = vunpack.c.l.b16 %v223
  %v366 = vunpack.c.h.b16 %v223
  %v367 = vunpack.c.l.b16 %v224
  %v368 = vunpack.c.h.b16 %v224
  %v369 = vunpack.c.l.b16 %v225
  %v370 = vunpack.c.h.b16 %v225
  %v371 = vunpack.c.l.b16 %v226
  %v372 = vunpack.c.h.b16 %v226
  %v373 = vunpack.c.l.b16 %v227
  %v374 = vunpack.c.h.b16 %v227
  %v375 = vunpack.c.l.b16 %v228
  %v376 = vunpack.c.h.b16 %v228
  %v377 = vunpack.c.l.b16 %v229
  %v378 = vunpack.c.h.b16 %v229
  %v379 = vunpack.c.l.b16 %v230
  %v380 = vunpack.c.h.b16 %v230
  %v381 = vunpack.c.l.b16 %v231
  %v382 = vunpack.c.h.b16 %v231
  %v383 = vunpack.c.l.b16 %v232
  %v384 = vunpack.c.h.b16 %v232
  %v385 = vunpack.c.l.b16 %v233
  %v386 = vunpack.c.h.b16 %v233
  %v387 = vunpack.c.l.b16 %v234
  %v388 = vunpack.c.h.b16 %v234
  %v389 = vunpack.c.l.b16 %v235
  %v390 = vunpack.c.h.b16 %v235
  %v391 = vunpack.c.l.b16 %v236
  %v392 = vunpack.c.h.b16 %v236
  %v393 = vunpack.c.l.b16 %v237
  %v394 = vunpack.c.h.b16 %v237
  %v395 = vunpack.c.l.b16 %v238
  %v396 = vunpack.c.h.b16 %v238
  %v397 = vunpack.c.l.b16 %v239
  %v398 = vunpack.c.h.b16 %v239
  %v399 = vunpack.c.l.b16 %v240
  %v400 = vunpack.c.h.b16 %v240
  %v401 = vunpack.c.l.b16 %v241
  %v402 = vunpack.c.h.b16 %v241
  %v403 = vunpack.c.l.b16 %v242
  %v404 = vunpack.c.h.b16 %v242
  %v405 = vunpack.c.l.b16 %v243
  %v406 = vunpack.c.h.b16 %v243
  %v407 = vunpack.c.l.b16 %v244
  %v408 = vunpack.c.h.b16 %v244
  %v409 = vunpack.c.l.b16 %v245
  %v410 = vunpack.c.h.b16 %v245
  %v411 = vunpack.c.l.b16 %v246
  %v412 = vunpack.c.h.b16 %v246
  %v413 = vunpack.c.l.b16 %v247
  %v414 = vunpack.c.h.b16 %v247
  %v415 = vunpack.c.l.b16 %v248
  %v416 = vunpack.c.h.b16 %v248
  %v417 = vunpack.c.l.b16 %v249
  %v418 = vunpack.c.h.b16 %v249
  %v419 = vunpack.c.l.b16 %v250
  %v420 = vunpack.c.h.b16 %v250
  %v421 = vunpack.c.l.b16 %v251
  %v422 = vunpack.c.h.b16 %v251
  %v423 = vunpack.c.l.b16 %v252
  %v424 = vunpack.c.h.b16 %v252
  %v425 = vunpack.c.l.b16 %v253
  %v426 = vunpack.c.h.b16 %v253
  %v427 = vunpack.c.l.b16 %v254
  %v428 = vunpack.c.h.b16 %v254
  %v429 = vunpack.c.l.b16 %v255
  %v430 = vunpack.c.h.b16 %v255
  %v431 = vunpack.c.l.b16 %v256
  %v432 = vunpack.c.h.b16 %v256
  %v433 = vunpack.c.l.b16 %v257
  %v434 = vunpack.c.h.b16 %v257
  %v435 = vunpack.c.l.b16 %v258
  %v436 = vunpack.c.h.b16 %v258
  %v437 = vunpack.c.l.b16 %v259
  %v438 = vunpack.c.h.b16 %v259
  %v439 = vunpack.c.l.b16 %v260
  %v440 = vunpack.c.h.b16 %v260
  %v441 = vunpack.c.l.b16 %v261
  %v442 = vunpack.c.h.b16 %v261
  %v443 = vunpack.c.l.b16 %v262
  %v444 = vunpack.c.h.b16 %v262
  %v445 = vunpack.c.l.b16 %v263
  %v446 = vunpack.c.h.b16 %v263
  %v447 = vunpack.c.l.b16 %v264
  %v448 = vunpack.c.h.b16 %v264
  %v449 = vunpack.c.l.b16 %v265
  %v450 = vunpack.c.h.b16 %v265
  %v451 = vunpack.c.l.b16 %v266
  %v452 = vunpack.c.h.b16 %v266
  %v453 = vunpack.c.l.b16 %v267
  %v454 = vunpack.c.h.b16 %v267
  %v455 = vunpack.c.l.b16 %v268
  %v456 = vunpack.c.h.b16 %v268
  %v457 = vunpack.c.l.b16 %v269
  %v458 = vunpack.c.h.b16 %v269
  %v459 = vunpack.c.l.b16 %v270
  %v460 = vunpack.c.h.b16 %v270
  %v461 = vunpack.c.l.b16 %v271
  %v462 = vunpack.c.h.b16 %v271
  %v463 = vunpack.c.l.b16 %v272
  %v464 = vunpack.c.h.b16 %v272
  %v465 = vunpack.c.l.b16 %v273
  %v466 = vunpack.c.h.b16 %v273
  %v467 = vunpack.c.l.b16 %v274
  %v468 = vunpack.c.h.b16 %v274
  %v469 = vunpack.c.l.b16 %v275
  %v470 = vunpack.c.h.b16 %v275
  %v471 = vunpack.c.l.b16 %v276
  %v472 = vunpack.c.h.b16 %v276
  %v473 = vunpack.c.l.b16 %v277
  %v474 = vunpack.c.h.b16 %v277
  %v475 = vunpack.c.l.b16 %v278
  %v476 = vunpack.c.h.b16 %v278
  %v477 = vunpack.c.l.b16 %v279
  %v478 = vunpack.c.h.b16 %v279
  %v479 = vunpack.c.l.b16 %v280
  %v480 = vunpack.c.h.b16 %v280
  %v481 = vunpack.c.l.b16 %v281
  %v482 = vunpack.c.h.b16 %v281
  %v483 = vunpack.c.l.b16 %v282
  %v484 = vunpack.c.h.b16 %v282
  %v485 = vunpack.c.l.b16 %v283
  %v486 = vunpack.c.h.b16 %v283
  %v487 = vunpack.c.l.b16 %v284
  %v488 = vunpack.c.h.b16 %v284
  %v489 = vpack.c.b16 %v363, %v361
  %v490 = vpack.c.b16 %v364, %v362
  %v491 = vpack.c.b16 %v367, %v365
  %v492 = vpack.c.b16 %v368, %v366
  %v493 = vpack.c.b16 %v371, %v369
  %v494 = vpack.c.b16 %v372, %v370
  %v495 = vpack.c.b16 %v375, %v373
  %v496 = vpack.c.b16 %v376, %v374
  %v497 = vpack.c.b16 %v379, %v377
  %v498 = vpack.c.b16 %v380, %v378
  %v499 = vpack.c.b16 %v383, %v381
  %v500 = vpack.c.b16 %v384, %v382
  %v501 = vpack.c.b16 %v387, %v385
  %v502 = vpack.c.b16 %v388, %v386
  %v503 = vpack.c.b16 %v391, %v389
  %v504 = vpack.c.b16 %v392, %v390
  %v505 = vpack.c.b16 %v395, %v393
  %v506 = vpack.c.b16 %v396, %v394
  %v507 = vpack.c.b16 %v399, %v397
  %v508 = vpack.c.b16 %v400, %v398
  %v509 = vpack.c.b16 %v403, %v401
  %v510 = vpack.c.b16 %v404, %v402
  %v511 = vpack.c.b16 %v407, %v405
  %v512 = vpack.c.b16 %v408, %v406
  %v513 = vpack.c.b16 %v411, %v409
  %v514 = vpack.c.b16 %v412, %v410
  %v515 = vpack.c.b16 %v415, %v413
  %v516 = vpack.c.b16 %v416, %v414
  %v517 = vpack.c.b16 %v419, %v417
  %v518 = vpack.c.b16 %v420, %v418
  %v519 = vpack.c.b16 %v423, %v421
  %v520 = vpack.c.b16 %v424, %v422
  %v521 = vpack.c.b16 %v427, %v425
  %v522 = vpack.c.b16 %v428, %v426
  %v523 = vpack.c.b16 %v431, %v429
  %v524 = vpack.c.b16 %v432, %v430
  %v525 = vpack.c.b16 %v435, %v433
  %v526 = vpack.c.b16 %v436, %v434
  %v527 = vpack.c.b16 %v439, %v437
  %v528 = vpack.c.b16 %v440, %v438
  %v529 = vpack.c.b16 %v443, %v441
  %v530 = vpack.c.b16 %v444, %v442
  %v531 = vpack.c.b16 %v447, %v445
  %v532 = vpack.c.b16 %v448, %v446
  %v533 = vpack.c.b16 %v451, %v449
  %v534 = vpack.c.b16 %v452, %v450
  %v535 = vpack.c.b16 %v455, %v453
  %v536 = vpack.c.b16 %v456, %v454
  %v537 = vpack.c.b16 %v459, %v457
  %v538 = vpack.c.b16 %v460, %v458
  %v539 = vpack.c.b16 %v463, %v461
  %v540 = vpack.c.b16 %v464, %v462
  %v541 = vpack.c.b16 %v467, %v465
  %v542 = vpack.c.b16 %v468, %v466
  %v543 = vpack.c.b16 %v471, %v469
  %v544 = vpack.c.b16 %v472, %v470
  %v545 = vpack.c.b16 %v475, %v473
  %v546 = vpack.c.b16 %v476, %v474
  %v547 = vpack.c.b16 %v479, %v477
  %v548 = vpack.c.b16 %v480, %v478
  %v549 = vpack.c.b16 %v483, %v481
  %v550 = vpack.c.b16 %v484, %v482
  %v551 = vpack.c.b16 %v487, %v485
  %v552 = vpack.c.b16 %v488, %v486
  %617 = vmatprep.subr.bf16.mxu0 %v490
  %618 = vmatpush1.bf16.msra.mxu0 %v489
  %619 = vmatprep.subr.bf16.mxu0 %v492
  %620 = vmatpush1.bf16.msra.mxu0 %v491
  %621 = vmatprep.subr.bf16.mxu0 %v494
  %622 = vmatpush1.bf16.msra.mxu0 %v493
  %623 = vmatprep.subr.bf16.mxu0 %v496
  %624 = vmatpush1.bf16.msra.mxu0 %v495
  %625 = vmatprep.subr.bf16.mxu0 %v498
  %626 = vmatpush1.bf16.msra.mxu0 %v497
  %627 = vmatprep.subr.bf16.mxu0 %v500
  %628 = vmatpush1.bf16.msra.mxu0 %v499
  %629 = vmatprep.subr.bf16.mxu0 %v502
  %630 = vmatpush1.bf16.msra.mxu0 %v501
  %631 = vmatprep.subr.bf16.mxu0 %v504
  %632 = vmatpush1.bf16.msra.mxu0 %v503
  %633 = vmatprep.subr.bf16.mxu0 %v506
  %634 = vmatpush1.bf16.msra.mxu0 %v505
  %635 = vmatprep.subr.bf16.mxu0 %v508
  %636 = vmatpush1.bf16.msra.mxu0 %v507
  %637 = vmatprep.subr.bf16.mxu0 %v510
  %638 = vmatpush1.bf16.msra.mxu0 %v509
  %639 = vmatprep.subr.bf16.mxu0 %v512
  %640 = vmatpush1.bf16.msra.mxu0 %v511
  %641 = vmatprep.subr.bf16.mxu0 %v514
  %642 = vmatpush1.bf16.msra.mxu0 %v513
  %643 = vmatprep.subr.bf16.mxu0 %v516
  %644 = vmatpush1.bf16.msra.mxu0 %v515
  %645 = vmatprep.subr.bf16.mxu0 %v518
  %646 = vmatpush1.bf16.msra.mxu0 %v517
  %647 = vmatprep.subr.bf16.mxu0 %v520
  %648 = vmatpush1.bf16.msra.mxu0 %v519
  %649 = vmatprep.mubr.bf16.mxu0 %v218
  %650 = vmatmul.mubr.bf16.gmra.mrb[0].mxu0 %v217
  %v651 = vpop.f32.mrb[0].mxu0
  %v652 = vadd.f32 %v290, %v651
  %v653 = vpop.f32.mrb[0].mxu0
  %v654 = vadd.f32 %v294, %v653
  %v655 = vpop.f32.mrb[0].mxu0
  %v656 = vadd.f32 %v290, %v655
  %v657 = vpop.f32.mrb[0].mxu0
  %v658 = vadd.f32 %v294, %v657
  %659 = vdwg.mxu0
  %660 = vmatprep.subr.bf16.mxu0 %v522
  %661 = vmatpush1.bf16.msra.mxu0 %v521
  %662 = vmatprep.subr.bf16.mxu0 %v524
  %663 = vmatpush1.bf16.msra.mxu0 %v523
  %664 = vmatprep.subr.bf16.mxu0 %v526
  %665 = vmatpush1.bf16.msra.mxu0 %v525
  %666 = vmatprep.subr.bf16.mxu0 %v528
  %667 = vmatpush1.bf16.msra.mxu0 %v527
  %668 = vmatprep.subr.bf16.mxu0 %v530
  %669 = vmatpush1.bf16.msra.mxu0 %v529
  %670 = vmatprep.subr.bf16.mxu0 %v532
  %671 = vmatpush1.bf16.msra.mxu0 %v531
  %672 = vmatprep.subr.bf16.mxu0 %v534
  %673 = vmatpush1.bf16.msra.mxu0 %v533
  %674 = vmatprep.subr.bf16.mxu0 %v536
  %675 = vmatpush1.bf16.msra.mxu0 %v535
  %676 = vmatprep.subr.bf16.mxu0 %v538
  %677 = vmatpush1.bf16.msra.mxu0 %v537
  %678 = vmatprep.subr.bf16.mxu0 %v540
  %679 = vmatpush1.bf16.msra.mxu0 %v539
  %680 = vmatprep.subr.bf16.mxu0 %v542
  %681 = vmatpush1.bf16.msra.mxu0 %v541
  %682 = vmatprep.subr.bf16.mxu0 %v544
  %683 = vmatpush1.bf16.msra.mxu0 %v543
  %684 = vmatprep.subr.bf16.mxu0 %v546
  %685 = vmatpush1.bf16.msra.mxu0 %v545
  %686 = vmatprep.subr.bf16.mxu0 %v548
  %687 = vmatpush1.bf16.msra.mxu0 %v547
  %688 = vmatprep.subr.bf16.mxu0 %v550
  %689 = vmatpush1.bf16.msra.mxu0 %v549
  %690 = vmatprep.subr.bf16.mxu0 %v552
  %691 = vmatpush1.bf16.msra.mxu0 %v551
  %692 = vmatprep.mubr.bf16.mxu0 %v220
  %693 = vmatmul.mubr.bf16.gmra.mrb[0].mxu0 %v219
  %v694 = vpop.f32.mrb[0].mxu0
  %v695 = vadd.f32 %v652, %v694
  %v696 = vpop.f32.mrb[0].mxu0
  %v697 = vadd.f32 %v654, %v696
  %v698 = vpop.f32.mrb[0].mxu0
  %v699 = vadd.f32 %v656, %v698
  %v700 = vpop.f32.mrb[0].mxu0
  %v701 = vadd.f32 %v658, %v700
  %702 = vdwg.mxu0
  %v703 = vmul.f32 %v695, 0.2
  %v704 = vmul.f32 %v697, 0.2
  %v705 = vmul.f32 %v699, 0.2
  %v706 = vmul.f32 %v701, 0.2
  %v707 = vmax.f32 %v695, %v703
  %v708 = vmax.f32 %v697, %v704
  %v709 = vmax.f32 %v699, %v705
  %v710 = vmax.f32 %v701, %v706
  %v711 = vld [vmem:[%s5] sm:$0x3]
  %v713 = vlaneseq
  %v714 = vshrl.u32 %v713, 7
  %v715 = vsub.s32 0, %v714
  %v716 = vrot.slane %v711, %v715
  %v717 = vlaneseq
  %v718 = vshrl.u32 %v717, 7
  %v719 = vsub.s32 1, %v718
  %v720 = vrot.slane %v711, %v719
  %v723 = vmul.f32 %v707, %v716
  %v724 = vmul.f32 %v708, %v720
  %v725 = vmul.f32 %v709, %v716
  %v726 = vmul.f32 %v710, %v720
  %v727 = vadd.f32 %v723, %v724
  %728 = vadd.xlane.f32.xlu0 %v727
  %v729 = vpop.xlane.xlu0 %728
  %v730 = vadd.f32 %v725, %v726
  %731 = vadd.xlane.f32.xlu0 %v730
  %v732 = vpop.xlane.xlu0 %731
  %v733 = vld [vmem:[#allocation2] sm:$0x1]
  %v735 = vlaneseq
  %v736 = vshrl.u32 %v735, 7
  %v737 = vsub.s32 0, %v736
  %v738 = vrot.slane %v733, %v737
  %v740 = vadd.f32 %v729, %v738
  %v741 = vadd.f32 %v732, %v738
  %v742 = vsub.f32 0.0, %v740
  %v743 = vsub.f32 0.0, %v741
  %v744 = vmul.f32 %v742, 1.442695
  %v745 = vpow.pop %v744
  %v746 = vmul.f32 %v743, 1.442695
  %v747 = vpow.pop %v746
  %v748 = vadd.f32 %v745, 1.0
  %v749 = vadd.f32 %v747, 1.0
  %v750 = vrcp.pop %v748
  %v751 = vmul.f32 1.0, %v750
  %v752 = vrcp.pop %v749
  %v753 = vmul.f32 1.0, %v752
  %vm754 = vcmask 7168
  %755 = vst.msk [vmem:[%s7] sm:$0xff] %vm754, %v751
  %756 = vst.msk [vmem:[%s7 + $0x8] sm:$0xff] %vm754, %v753
  // Predicated region
  $region30: #{_forward_impl.1} parent=0 // pred_check
    _
  $region31: #{_forward_impl.1} parent=0 // pred_check_branch
    %758 = sbr.rel (0) target = $region33
  $region32: #{_forward_impl.1} parent=0 // pred_region
    _
  $region33: #{_forward_impl.1} parent=0 // pred_fallthru
    _
  // Predicated region
  $region34: #{_forward_impl.1} parent=0 // pred_check
    _
  $region35: #{_forward_impl.1} parent=0 // pred_check_branch
    %760 = sbr.rel (0) target = $region37
  $region36: #{_forward_impl.1} parent=0 // pred_region
    _
  $region37: #{_forward_impl.1} parent=0 // pred_fallthru
    _

</llo_original>
